<compile_context>
chip_gen: v7x
topology: tpu7x:2x2x1
jax: 0.10.0
libtpu: 0.0.40
codegen_flags: <defaults>
</compile_context>

<pallas_src>
import functools

import jax
import jax.numpy as jnp
from jax import lax
from jax.experimental import pallas as pl
from jax.experimental.pallas import tpu as pltpu

LANE = 128        # lane width (last-dim tiling unit)
_UNROLL_MAX = 8   # statically unroll the hidden stack up to this depth


def _round_up(x, m):
    return ((x + m - 1) // m) * m


def _vmem_capacity_bytes():
    """Physical VMEM per TensorCore, with a conservative fallback (v7x)."""
    try:
        cap = getattr(pltpu.get_tpu_info(), "vmem_capacity_bytes", None)
        if cap:
            return int(cap)
    except Exception:
        pass
    return 64 * 1024 * 1024


# ---------------------------------------------------------------------------
# Fused kernel: x -> tanh(x@W0+b0) -> [tanh(.@Whi+bhi)]*n -> .@Wo+bo
# ---------------------------------------------------------------------------
def _fnn_kernel(*refs, n_hidden, compute_dtype):
    if n_hidden > 0:
        x_ref, w0_ref, b0_ref, wh_ref, bh_ref, wo_ref, bo_ref, o_ref = refs
    else:
        x_ref, w0_ref, b0_ref, wo_ref, bo_ref, o_ref = refs
        wh_ref = bh_ref = None

    # Layer 0: cast activations to the MXU compute dtype in-kernel, accumulate
    # in f32, bias-add + tanh in f32.  Padded rows/cols are exact zeros.
    x = x_ref[...].astype(compute_dtype)
    h = jnp.dot(x, w0_ref[...], preferred_element_type=jnp.float32)
    act = jnp.tanh(h + b0_ref[...]).astype(compute_dtype)

    # Hidden layers: activation carried in registers (no VMEM round-trip).
    def layer(i, a):
        hh = jnp.dot(a, wh_ref[i], preferred_element_type=jnp.float32)
        return jnp.tanh(hh + bh_ref[i]).astype(compute_dtype)

    if n_hidden > 0:
        if n_hidden <= _UNROLL_MAX:
            for i in range(n_hidden):
                act = layer(i, act)
        else:
            act = lax.fori_loop(0, n_hidden, layer, act)

    # Output layer (no tanh); lane-dense store of the padded (TB, Doutp) tile.
    o = jnp.dot(act, wo_ref[...], preferred_element_type=jnp.float32)
    o_ref[...] = (o + bo_ref[...]).astype(o_ref.dtype)


# ---------------------------------------------------------------------------
# Wrapper: pad to TPU-friendly shapes, build specs, single pallas_call.
# ---------------------------------------------------------------------------
def fnn_pallas(x, w0, b0, wh, bh, wo, bo, *, compute_dtype=jnp.bfloat16):
    """x: (B, Din); w0: (Din, H); wh: (n_hidden, H, H); wo: (H, Dout)."""
    B, Din = x.shape
    H = w0.shape[1]
    Dout = wo.shape[1]
    n_hidden = int(wh.shape[0])

    cdt = jnp.dtype(compute_dtype)
    sub = 16 if cdt.itemsize == 2 else 8          # sublane packing of compute dtype

    Dinp = _round_up(Din, LANE)
    Hp = _round_up(H, LANE)
    Doutp = _round_up(Dout, LANE)

    # Batch tile: big enough to fill the MXU on v6e/v7x; Bp is a multiple of
    # TB so every row is computed (no truncated tail tile).
    TB = min(_round_up(B, sub), 512)
    Bp = _round_up(B, TB)
    grid = (Bp // TB,)

    f32 = jnp.float32

    def pad2(a, r, c):
        pr, pc = r - a.shape[0], c - a.shape[1]
        if pr or pc:
            a = jnp.pad(a, ((0, pr), (0, pc)))
        return a

    # Activations keep their input dtype (cast to compute dtype inside the
    # kernel); only pad when actually needed (avoids an extra HBM pre-pass).
    x_p = pad2(x, Bp, Dinp)

    w0_p = pad2(w0, Dinp, Hp).astype(cdt)
    wo_p = pad2(wo, Hp, Doutp).astype(cdt)
    b0_p = jnp.pad(b0.astype(f32), (0, Hp - H)).reshape(1, Hp)
    bo_p = jnp.pad(bo.astype(f32), (0, Doutp - Dout)).reshape(1, Doutp)

    inputs = [x_p, w0_p, b0_p]
    in_specs = [
        pl.BlockSpec((TB, Dinp), lambda i: (i, 0)),
        pl.BlockSpec((Dinp, Hp), lambda i: (0, 0)),
        pl.BlockSpec((1, Hp), lambda i: (0, 0)),
    ]
    wh_p = bh_p = None
    if n_hidden > 0:
        wh_p = jnp.pad(wh, ((0, 0), (0, Hp - H), (0, Hp - H))).astype(cdt)
        bh_p = jnp.pad(bh.astype(f32), ((0, 0), (0, Hp - H))).reshape(
            n_hidden, 1, Hp)
        inputs += [wh_p, bh_p]
        in_specs += [
            pl.BlockSpec((n_hidden, Hp, Hp), lambda i: (0, 0, 0)),
            pl.BlockSpec((n_hidden, 1, Hp), lambda i: (0, 0, 0)),
        ]
    inputs += [wo_p, bo_p]
    in_specs += [
        pl.BlockSpec((Hp, Doutp), lambda i: (0, 0)),
        pl.BlockSpec((1, Doutp), lambda i: (0, 0)),
    ]

    # ---- cost / VMEM accounting -------------------------------------------
    nbytes = lambda a: int(a.size) * a.dtype.itemsize
    weight_bytes = nbytes(w0_p) + nbytes(b0_p) + nbytes(wo_p) + nbytes(bo_p)
    if n_hidden > 0:
        weight_bytes += nbytes(wh_p) + nbytes(bh_p)

    out_bytes = Bp * Doutp * 4
    bytes_accessed = nbytes(x_p) + weight_bytes + out_bytes
    flops = 2 * Bp * (Dinp * Hp + n_hidden * Hp * Hp + Hp * Doutp)
    transcendentals = Bp * Hp * (1 + n_hidden)

    # Pallas double-buffers inputs even with constant index_maps -> count the
    # resident weights twice; I/O tiles are double-buffered; add the carried
    # activation (register/compiler-managed VMEM) as margin.
    io_tile_bytes = 2 * TB * Dinp * x_p.dtype.itemsize + 2 * TB * Doutp * 4
    act_bytes = TB * Hp * 4
    vmem_needed = 2 * weight_bytes + io_tile_bytes + act_bytes

    hw_cap = max(_vmem_capacity_bytes() - 8 * 1024 * 1024, 32 * 1024 * 1024)
    vmem_limit = int(min(max(2 * vmem_needed, 16 * 1024 * 1024), hw_cap))

    kernel = functools.partial(_fnn_kernel, n_hidden=n_hidden,
                               compute_dtype=cdt)
    out_p = pl.pallas_call(
        kernel,
        out_shape=jax.ShapeDtypeStruct((Bp, Doutp), f32),
        grid=grid,
        in_specs=in_specs,
        out_specs=pl.BlockSpec((TB, Doutp), lambda i: (i, 0)),
        compiler_params=pltpu.CompilerParams(
            dimension_semantics=("parallel",),
            vmem_limit_bytes=vmem_limit,
        ),
        cost_estimate=pl.CostEstimate(
            flops=int(flops),
            transcendentals=int(transcendentals),
            bytes_accessed=int(bytes_accessed),
        ),
    )(*inputs)

    return out_p[:B, :Dout].astype(x.dtype)


# ---------------------------------------------------------------------------
# Parameter init (mirrors the PyTorch module layout), packing, and reference.
# ---------------------------------------------------------------------------
def init_params(config, key):
    """Returns list of (W (in,out), b (out,), apply_tanh) per Linear layer."""
    n_hidden = config["n_hidden"]
    dims = [(config["input_size"], config["hidden_size"])]
    dims += [(config["hidden_size"], config["hidden_size"])] * n_hidden
    dims += [(config["hidden_size"], config["output_size"])]

    params = []
    n_layers = len(dims)
    for li, (din, dout) in enumerate(dims):
        key, kw, kb = jax.random.split(key, 3)
        scale = 1.0 / jnp.sqrt(jnp.float32(din))  # ~ PyTorch Linear default
        w = jax.random.uniform(kw, (din, dout), jnp.float32, -scale, scale)
        b = jax.random.uniform(kb, (dout,), jnp.float32, -scale, scale)
        params.append((w, b, li < n_layers - 1))  # last Linear has no Tanh
    return params


def pack_params(params):
    """Split into first / stacked-hidden / last layer arrays for the kernel."""
    w0, b0, _ = params[0]
    wo, bo, _ = params[-1]
    hidden = params[1:-1]
    H = w0.shape[1]
    if hidden:
        wh = jnp.stack([w for (w, _, _) in hidden])
        bh = jnp.stack([b for (_, b, _) in hidden])
    else:
        wh = jnp.zeros((0, H, H), w0.dtype)
        bh = jnp.zeros((0, H), w0.dtype)
    return w0, b0, wh, bh, wo, bo


def ref_forward(x, params, compute_dtype=None):
    """Plain-JAX reference.  If compute_dtype is given, matmul operands are
    rounded to it (matching the kernel's mixed-precision path), f32 accum."""
    out = x.astype(jnp.float32)
    for w, b, apply_tanh in params:
        a, wm = out, w.astype(jnp.float32)
        if compute_dtype is not None:
            a = a.astype(compute_dtype).astype(jnp.float32)
            wm = w.astype(compute_dtype).astype(jnp.float32)
        out = a @ wm + b
        if apply_tanh:
            out = jnp.tanh(out)
    return out


if __name__ == "__main__":
    key = jax.random.PRNGKey(0)

    # ------------------------------------------------------------------ A --
    config = {"n_hidden": 2, "input_size": 16, "hidden_size": 32,
              "output_size": 8}
    batch = 8
    key, kx, kp = jax.random.split(key, 3)
    x = jax.random.normal(kx, (batch, config["input_size"]), jnp.float32)
    params = init_params(config, kp)
    packed = pack_params(params)

    # f32 compute path (exact vs plain-JAX f32 reference).
    out_f32 = fnn_pallas(x, *packed, compute_dtype=jnp.float32)
    jax.block_until_ready(out_f32)
    ref_f32 = ref_forward(x, params)
    assert out_f32.shape == (batch, config["output_size"])
    assert jnp.allclose(out_f32, ref_f32, atol=1e-5, rtol=1e-5)

    # bf16 compute path (default): tight vs quantization-matched reference,
    # loose vs pure-f32 reference.
    out_bf16 = fnn_pallas(x, *packed)
    jax.block_until_ready(out_bf16)
    ref_q = ref_forward(x, params, jnp.bfloat16)
    assert out_bf16.shape == (batch, config["output_size"])
    assert jnp.allclose(out_bf16, ref_q, atol=5e-3, rtol=5e-3)
    assert jnp.allclose(out_bf16, ref_f32, atol=5e-2, rtol=5e-2)

    # ------------------------------------------------------------------ B --
    # Deep config exercises the lax.fori_loop hidden-layer path.
    deep_cfg = {"n_hidden": 10, "input_size": 8, "hidden_size": 16,
                "output_size": 4}
    key, kxd, kpd = jax.random.split(key, 3)
    xd = jax.random.normal(kxd, (4, deep_cfg["input_size"]), jnp.float32)
    params_d = init_params(deep_cfg, kpd)
    out_deep = fnn_pallas(xd, *pack_params(params_d))
    jax.block_until_ready(out_deep)
    ref_deep = ref_forward(xd, params_d, jnp.bfloat16)
    assert out_deep.shape == (4, deep_cfg["output_size"])
    assert jnp.allclose(out_deep, ref_deep, atol=1e-2, rtol=1e-2)

    print("KERNEL_OK")
</pallas_src>

<mosaic_0001>
module attributes {stable_mosaic.version = 11 : i64} {
  func.func @_fnn_kernel(%arg0: i32, %arg1: memref<8x128xf32, #tpu.memory_space<vmem>>, %arg2: memref<128x128xf32, #tpu.memory_space<vmem>>, %arg3: memref<1x128xf32, #tpu.memory_space<vmem>>, %arg4: memref<2x128x128xf32, #tpu.memory_space<vmem>>, %arg5: memref<2x1x128xf32, #tpu.memory_space<vmem>>, %arg6: memref<128x128xf32, #tpu.memory_space<vmem>>, %arg7: memref<1x128xf32, #tpu.memory_space<vmem>>, %arg8: memref<8x128xf32, #tpu.memory_space<vmem>>) attributes {dimension_semantics = [#tpu.dimension_semantics<parallel>], iteration_bounds = array<i64: 1>, scalar_prefetch = 0 : i64, scratch_operands = 0 : i64, tpu.core_type = #tpu.core_type<tc>, window_params = [{transform_indices = @transform_0, window_bounds = array<i64: 8, 128>}, {pipeline_mode = #tpu.pipeline_mode<synchronous>, transform_indices = @transform_1, window_bounds = array<i64: 128, 128>}, {pipeline_mode = #tpu.pipeline_mode<synchronous>, transform_indices = @transform_2, window_bounds = array<i64: 1, 128>}, {pipeline_mode = #tpu.pipeline_mode<synchronous>, transform_indices = @transform_3, window_bounds = array<i64: 2, 128, 128>}, {pipeline_mode = #tpu.pipeline_mode<synchronous>, transform_indices = @transform_4, window_bounds = array<i64: 2, 1, 128>}, {pipeline_mode = #tpu.pipeline_mode<synchronous>, transform_indices = @transform_5, window_bounds = array<i64: 128, 128>}, {pipeline_mode = #tpu.pipeline_mode<synchronous>, transform_indices = @transform_6, window_bounds = array<i64: 1, 128>}, {transform_indices = @transform_7, window_bounds = array<i64: 8, 128>}]} {
    %c0 = arith.constant 0 : index
    %c0_0 = arith.constant 0 : index
    %0 = vector.load %arg1[%c0, %c0_0] : memref<8x128xf32, #tpu.memory_space<vmem>>, vector<8x128xf32>
    %c0_1 = arith.constant 0 : index
    %c0_2 = arith.constant 0 : index
    %1 = vector.load %arg2[%c0_1, %c0_2] : memref<128x128xf32, #tpu.memory_space<vmem>>, vector<128x128xf32>
    %cst = arith.constant dense<0.000000e+00> : vector<8x128xf32>
    %2 = tpu.matmul %0, %1, %cst {dimension_numbers = #tpu.dot_dimension_numbers<[1], [0], [0], [1], [0, 0, 1, 1], [], []>} : vector<8x128xf32>, vector<128x128xf32>, vector<8x128xf32> -> vector<8x128xf32>
    %c0_3 = arith.constant 0 : index
    %c0_4 = arith.constant 0 : index
    %3 = vector.load %arg3[%c0_3, %c0_4] : memref<1x128xf32, #tpu.memory_space<vmem>>, vector<1x128xf32>
    %4 = vector.broadcast %3 : vector<1x128xf32> to vector<8x128xf32>
    %5 = arith.addf %2, %4 : vector<8x128xf32>
    %6 = math.tanh %5 : vector<8x128xf32>
    %c0_5 = arith.constant 0 : index
    %c0_6 = arith.constant 0 : index
    %c0_7 = arith.constant 0 : index
    %7 = vector.load %arg4[%c0_5, %c0_6, %c0_7] : memref<2x128x128xf32, #tpu.memory_space<vmem>>, vector<1x128x128xf32>
    %8 = vector.shape_cast %7 : vector<1x128x128xf32> to vector<128x128xf32>
    %cst_8 = arith.constant dense<0.000000e+00> : vector<8x128xf32>
    %9 = tpu.matmul %6, %8, %cst_8 {dimension_numbers = #tpu.dot_dimension_numbers<[1], [0], [0], [1], [0, 0, 1, 1], [], []>} : vector<8x128xf32>, vector<128x128xf32>, vector<8x128xf32> -> vector<8x128xf32>
    %c0_9 = arith.constant 0 : index
    %c0_10 = arith.constant 0 : index
    %c0_11 = arith.constant 0 : index
    %10 = vector.load %arg5[%c0_9, %c0_10, %c0_11] : memref<2x1x128xf32, #tpu.memory_space<vmem>>, vector<1x1x128xf32>
    %11 = vector.shape_cast %10 : vector<1x1x128xf32> to vector<1x128xf32>
    %12 = vector.broadcast %11 : vector<1x128xf32> to vector<8x128xf32>
    %13 = arith.addf %9, %12 : vector<8x128xf32>
    %14 = math.tanh %13 : vector<8x128xf32>
    %c1 = arith.constant 1 : index
    %c0_12 = arith.constant 0 : index
    %c0_13 = arith.constant 0 : index
    %15 = vector.load %arg4[%c1, %c0_12, %c0_13] : memref<2x128x128xf32, #tpu.memory_space<vmem>>, vector<1x128x128xf32>
    %16 = vector.shape_cast %15 : vector<1x128x128xf32> to vector<128x128xf32>
    %cst_14 = arith.constant dense<0.000000e+00> : vector<8x128xf32>
    %17 = tpu.matmul %14, %16, %cst_14 {dimension_numbers = #tpu.dot_dimension_numbers<[1], [0], [0], [1], [0, 0, 1, 1], [], []>} : vector<8x128xf32>, vector<128x128xf32>, vector<8x128xf32> -> vector<8x128xf32>
    %c1_15 = arith.constant 1 : index
    %c0_16 = arith.constant 0 : index
    %c0_17 = arith.constant 0 : index
    %18 = vector.load %arg5[%c1_15, %c0_16, %c0_17] : memref<2x1x128xf32, #tpu.memory_space<vmem>>, vector<1x1x128xf32>
    %19 = vector.shape_cast %18 : vector<1x1x128xf32> to vector<1x128xf32>
    %20 = vector.broadcast %19 : vector<1x128xf32> to vector<8x128xf32>
    %21 = arith.addf %17, %20 : vector<8x128xf32>
    %22 = math.tanh %21 : vector<8x128xf32>
    %c0_18 = arith.constant 0 : index
    %c0_19 = arith.constant 0 : index
    %23 = vector.load %arg6[%c0_18, %c0_19] : memref<128x128xf32, #tpu.memory_space<vmem>>, vector<128x128xf32>
    %cst_20 = arith.constant dense<0.000000e+00> : vector<8x128xf32>
    %24 = tpu.matmul %22, %23, %cst_20 {dimension_numbers = #tpu.dot_dimension_numbers<[1], [0], [0], [1], [0, 0, 1, 1], [], []>} : vector<8x128xf32>, vector<128x128xf32>, vector<8x128xf32> -> vector<8x128xf32>
    %c0_21 = arith.constant 0 : index
    %c0_22 = arith.constant 0 : index
    %25 = vector.load %arg7[%c0_21, %c0_22] : memref<1x128xf32, #tpu.memory_space<vmem>>, vector<1x128xf32>
    %26 = vector.broadcast %25 : vector<1x128xf32> to vector<8x128xf32>
    %27 = arith.addf %24, %26 : vector<8x128xf32>
    %c0_23 = arith.constant 0 : index
    %c0_24 = arith.constant 0 : index
    %28 = vector.load %arg8[%c0_23, %c0_24] : memref<8x128xf32, #tpu.memory_space<vmem>>, vector<8x128xf32>
    tpu.vector_store %arg8[%c0_23, %c0_24], %27 {strides = array<i32>} : memref<8x128xf32, #tpu.memory_space<vmem>>, vector<8x128xf32>,
    return
  }
  func.func @transform_0(%arg0: i32) -> (i32, i32) {
    %c0_i32 = arith.constant 0 : i32
    %c0_i32_0 = arith.constant 0 : i32
    return %arg0, %c0_i32 : i32, i32
  }
  func.func @transform_1(%arg0: i32) -> (i32, i32) {
    %c0_i32 = arith.constant 0 : i32
    %c0_i32_0 = arith.constant 0 : i32
    %c0_i32_1 = arith.constant 0 : i32
    return %c0_i32, %c0_i32_0 : i32, i32
  }
  func.func @transform_2(%arg0: i32) -> (i32, i32) {
    %c0_i32 = arith.constant 0 : i32
    %c0_i32_0 = arith.constant 0 : i32
    %c0_i32_1 = arith.constant 0 : i32
    return %c0_i32, %c0_i32_0 : i32, i32
  }
  func.func @transform_3(%arg0: i32) -> (i32, i32, i32) {
    %c0_i32 = arith.constant 0 : i32
    %c0_i32_0 = arith.constant 0 : i32
    %c0_i32_1 = arith.constant 0 : i32
    %c0_i32_2 = arith.constant 0 : i32
    return %c0_i32, %c0_i32_0, %c0_i32_1 : i32, i32, i32
  }
  func.func @transform_4(%arg0: i32) -> (i32, i32, i32) {
    %c0_i32 = arith.constant 0 : i32
    %c0_i32_0 = arith.constant 0 : i32
    %c0_i32_1 = arith.constant 0 : i32
    %c0_i32_2 = arith.constant 0 : i32
    return %c0_i32, %c0_i32_0, %c0_i32_1 : i32, i32, i32
  }
  func.func @transform_5(%arg0: i32) -> (i32, i32) {
    %c0_i32 = arith.constant 0 : i32
    %c0_i32_0 = arith.constant 0 : i32
    %c0_i32_1 = arith.constant 0 : i32
    return %c0_i32, %c0_i32_0 : i32, i32
  }
  func.func @transform_6(%arg0: i32) -> (i32, i32) {
    %c0_i32 = arith.constant 0 : i32
    %c0_i32_0 = arith.constant 0 : i32
    %c0_i32_1 = arith.constant 0 : i32
    return %c0_i32, %c0_i32_0 : i32, i32
  }
  func.func @transform_7(%arg0: i32) -> (i32, i32) {
    %c0_i32 = arith.constant 0 : i32
    %c0_i32_0 = arith.constant 0 : i32
    return %arg0, %c0_i32 : i32, i32
  }
}

</mosaic_0001>

<llo_original>
// kernel: tpu_custom_call.1
$region0: #{tpu_custom_call.1}
  #allocation0 [shape = 'u32[]', space=smem, size = 0x4, offset = 0x4, fixed_abs, tag = 'smem constant byte address 0x4 - core index']
  #allocation1 [shape = 'u32[144,128]{1,0:T(1,128)}', space=vmem, size = 0x12000, scoped, tag = 'internal scratch']
  %s0 = inlined_call_operand.hbm [shape: f32[8,128], index: 0, kind: input, shape index: {}]
  %s1 = inlined_call_operand.hbm [shape: f32[128,128], index: 1, kind: input, shape index: {}]
  %s2 = inlined_call_operand.vmem [shape: f32[1,128], index: 2, kind: input, shape index: {}]
  %s3 = inlined_call_operand.hbm [shape: f32[2,128,128], index: 3, kind: input, shape index: {}]
  %s4 = inlined_call_operand.vmem [shape: f32[2,1,128], index: 4, kind: input, shape index: {}]
  %s5 = inlined_call_operand.hbm [shape: f32[128,128], index: 5, kind: input, shape index: {}]
  %s6 = inlined_call_operand.vmem [shape: f32[1,128], index: 6, kind: input, shape index: {}]
  %s7 = inlined_call_operand.hbm [shape: f32[8,128], index: 7, kind: output, shape index: {}]
  %s8 = sld [smem:[#allocation0]]
  $region54: #{tpu_custom_call.1} parent=0
    _
  %s10 = ssub.s32 1, %s8
  %s11 = scalar_select 0, %s10, %s8
  $region1: #{tpu_custom_call.1} parent=0
    #allocation2 [shape = 'u8[4096]{0}', space=vmem, size = 0x1000, scoped, tag = 'input window, operand 0, single buffered']
    #allocation3 [shape = 's32[1]{0}', space=sflag, size = 0x4, scoped, tag = 'scoped memory for tpu_custom_call.1']
    #allocation4 [shape = 's32[1]{0}', space=sflag, size = 0x4, scoped, tag = 'scoped memory for tpu_custom_call.1']
    #allocation5 [shape = 'u8[65536]{0}', space=vmem, size = 0x10000, scoped, tag = 'input window, operand 1, single buffered']
    #allocation6 [shape = 's32[1]{0}', space=sflag, size = 0x4, scoped, tag = 'scoped memory for tpu_custom_call.1']
    #allocation7 [shape = 'u8[131072]{0}', space=vmem, size = 0x20000, scoped, tag = 'input window, operand 3, single buffered']
    #allocation8 [shape = 'u8[65536]{0}', space=vmem, size = 0x10000, scoped, tag = 'input window, operand 5, single buffered']
    #allocation9 [shape = 's32[1]{0}', space=sflag, size = 0x4, scoped, tag = 'scoped memory for tpu_custom_call.1']
    #allocation10 [shape = 'u8[4096]{0}', space=vmem, size = 0x1000, scoped, tag = 'output window, operand 0, single buffered']
    %12 = vsyncpa [#allocation3], 0
    %13 = vsyncpa [#allocation6], 0
    %14 = vsyncpa [#allocation9], 0
    %15 = vsyncpa [#allocation4], 0
    // Predicated region
    $region2: #{tpu_custom_call.1} parent=1 // pred_check
      _
    $region3: #{tpu_custom_call.1} parent=1 // pred_check_branch
      %17 = sbr.rel (0) target = $region5
    $region4: #{tpu_custom_call.1} parent=1 // pred_region
      %s19 = ssub.s32 128, 128
      %20 = vsyncadd [#allocation3], %s19
      %s22 = sshll.u32 [#allocation2], 4
      %s23 = int_to_ptr.vmem [resolvable:$true] %s22
      %25 = dma.hbm_to_vmem [thread:$0]  %s0, 128, %s23, [#allocation3]
    $region5: #{tpu_custom_call.1} parent=1 // pred_fallthru
      _
    // Predicated region
    $region6: #{tpu_custom_call.1} parent=1 // pred_check
      _
    $region7: #{tpu_custom_call.1} parent=1 // pred_check_branch
      %27 = sbr.rel (0) target = $region9
    $region8: #{tpu_custom_call.1} parent=1 // pred_region
      %s29 = ssub.s32 2048, 2048
      %30 = vsyncadd [#allocation6], %s29
      %s31 = sshll.u32 [#allocation5], 4
      %s32 = int_to_ptr.vmem [resolvable:$true] %s31
      %37 = dma.hbm_to_vmem [thread:$0]  %s1, 2048, %s32, [#allocation6], 128, 128, 8
    $region9: #{tpu_custom_call.1} parent=1 // pred_fallthru
      _
    // Predicated region
    $region10: #{tpu_custom_call.1} parent=1 // pred_check
      _
    $region11: #{tpu_custom_call.1} parent=1 // pred_check_branch
      %39 = sbr.rel (0) target = $region13
    $region12: #{tpu_custom_call.1} parent=1 // pred_region
      _
    $region13: #{tpu_custom_call.1} parent=1 // pred_fallthru
      _
    // Predicated region
    $region14: #{tpu_custom_call.1} parent=1 // pred_check
      _
    $region15: #{tpu_custom_call.1} parent=1 // pred_check_branch
      %41 = sbr.rel (0) target = $region17
    $region16: #{tpu_custom_call.1} parent=1 // pred_region
      %s43 = ssub.s32 4096, 4096
      %44 = vsyncadd [#allocation6], %s43
      %s45 = sshll.u32 [#allocation7], 4
      %s46 = int_to_ptr.vmem [resolvable:$true] %s45
      %51 = dma.hbm_to_vmem [thread:$0]  %s3, 4096, %s46, [#allocation6], 128, 128, 8
    $region17: #{tpu_custom_call.1} parent=1 // pred_fallthru
      _
    // Predicated region
    $region18: #{tpu_custom_call.1} parent=1 // pred_check
      _
    $region19: #{tpu_custom_call.1} parent=1 // pred_check_branch
      %53 = sbr.rel (0) target = $region21
    $region20: #{tpu_custom_call.1} parent=1 // pred_region
      _
    $region21: #{tpu_custom_call.1} parent=1 // pred_fallthru
      _
    // Predicated region
    $region22: #{tpu_custom_call.1} parent=1 // pred_check
      _
    $region23: #{tpu_custom_call.1} parent=1 // pred_check_branch
      %55 = sbr.rel (0) target = $region25
    $region24: #{tpu_custom_call.1} parent=1 // pred_region
      %s57 = ssub.s32 2048, 2048
      %58 = vsyncadd [#allocation9], %s57
      %s59 = sshll.u32 [#allocation8], 4
      %s60 = int_to_ptr.vmem [resolvable:$true] %s59
      %65 = dma.hbm_to_vmem [thread:$0]  %s5, 2048, %s60, [#allocation9], 128, 128, 8
    $region25: #{tpu_custom_call.1} parent=1 // pred_fallthru
      _
    // Predicated region
    $region26: #{tpu_custom_call.1} parent=1 // pred_check
      _
    $region27: #{tpu_custom_call.1} parent=1 // pred_check_branch
      %67 = sbr.rel (0) target = $region29
    $region28: #{tpu_custom_call.1} parent=1 // pred_region
      _
    $region29: #{tpu_custom_call.1} parent=1 // pred_fallthru
      _
    // Predicated region
    $region30: #{tpu_custom_call.1} parent=1 // pred_check
      _
    $region31: #{tpu_custom_call.1} parent=1 // pred_check_branch
      %69 = sbr.rel (0) target = $region33
    $region32: #{tpu_custom_call.1} parent=1 // pred_region
      %70 = dma.done [#allocation3], 128
    $region33: #{tpu_custom_call.1} parent=1 // pred_fallthru
      _
    // Predicated region
    $region34: #{tpu_custom_call.1} parent=1 // pred_check
      _
    $region35: #{tpu_custom_call.1} parent=1 // pred_check_branch
      %72 = sbr.rel (0) target = $region37
    $region36: #{tpu_custom_call.1} parent=1 // pred_region
      %73 = dma.done [#allocation6], 2048
    $region37: #{tpu_custom_call.1} parent=1 // pred_fallthru
      _
    // Predicated region
    $region38: #{tpu_custom_call.1} parent=1 // pred_check
      _
    $region39: #{tpu_custom_call.1} parent=1 // pred_check_branch
      %75 = sbr.rel (0) target = $region41
    $region40: #{tpu_custom_call.1} parent=1 // pred_region
      %76 = dma.done [#allocation6], 4096
    $region41: #{tpu_custom_call.1} parent=1 // pred_fallthru
      _
    // Predicated region
    $region42: #{tpu_custom_call.1} parent=1 // pred_check
      _
    $region43: #{tpu_custom_call.1} parent=1 // pred_check_branch
      %78 = sbr.rel (0) target = $region45
    $region44: #{tpu_custom_call.1} parent=1 // pred_region
      %79 = dma.done [#allocation9], 2048
    $region45: #{tpu_custom_call.1} parent=1 // pred_fallthru
      _
    %v80 = vld [vmem:[#allocation2] sm:$0xff]
    %v81 = vld [vmem:[#allocation5] sm:$0xff]
    %v82 = vld [vmem:[#allocation5 + $0x8] sm:$0xff]
    %v83 = vld [vmem:[#allocation5 + $0x10] sm:$0xff]
    %v84 = vld [vmem:[#allocation5 + $0x18] sm:$0xff]
    %v85 = vld [vmem:[#allocation5 + $0x20] sm:$0xff]
    %v86 = vld [vmem:[#allocation5 + $0x28] sm:$0xff]
    %v87 = vld [vmem:[#allocation5 + $0x30] sm:$0xff]
    %v88 = vld [vmem:[#allocation5 + $0x38] sm:$0xff]
    %v89 = vld [vmem:[#allocation5 + $0x40] sm:$0xff]
    %v90 = vld [vmem:[#allocation5 + $0x48] sm:$0xff]
    %v91 = vld [vmem:[#allocation5 + $0x50] sm:$0xff]
    %v92 = vld [vmem:[#allocation5 + $0x58] sm:$0xff]
    %v93 = vld [vmem:[#allocation5 + $0x60] sm:$0xff]
    %v94 = vld [vmem:[#allocation5 + $0x68] sm:$0xff]
    %v95 = vld [vmem:[#allocation5 + $0x70] sm:$0xff]
    %v96 = vld [vmem:[#allocation5 + $0x78] sm:$0xff]
    %v97 = vld [vmem:[%s2] sm:$0x1]
    %v99 = vlaneseq
    %v100 = vshrl.u32 %v99, 7
    %v101 = vsub.s32 0, %v100
    %v102 = vrot.slane %v97, %v101
    %104 = vmatprep.subr.mxu0 0.0
    %105 = vmatpush1.msra.mxu0 %v81
    %106 = vmatprep.subr.mxu0 0.0
    %107 = vmatpush1.msra.mxu0 %v82
    %108 = vmatprep.subr.mxu0 0.0
    %109 = vmatpush1.msra.mxu0 %v83
    %110 = vmatprep.subr.mxu0 0.0
    %111 = vmatpush1.msra.mxu0 %v84
    %112 = vmatprep.subr.mxu0 0.0
    %113 = vmatpush1.msra.mxu0 %v85
    %114 = vmatprep.subr.mxu0 0.0
    %115 = vmatpush1.msra.mxu0 %v86
    %116 = vmatprep.subr.mxu0 0.0
    %117 = vmatpush1.msra.mxu0 %v87
    %118 = vmatprep.subr.mxu0 0.0
    %119 = vmatpush1.msra.mxu0 %v88
    %120 = vmatprep.subr.mxu0 0.0
    %121 = vmatpush1.msra.mxu0 %v89
    %122 = vmatprep.subr.mxu0 0.0
    %123 = vmatpush1.msra.mxu0 %v90
    %124 = vmatprep.subr.mxu0 0.0
    %125 = vmatpush1.msra.mxu0 %v91
    %126 = vmatprep.subr.mxu0 0.0
    %127 = vmatpush1.msra.mxu0 %v92
    %128 = vmatprep.subr.mxu0 0.0
    %129 = vmatpush1.msra.mxu0 %v93
    %130 = vmatprep.subr.mxu0 0.0
    %131 = vmatpush1.msra.mxu0 %v94
    %132 = vmatprep.subr.mxu0 0.0
    %133 = vmatpush1.msra.mxu0 %v95
    %134 = vmatprep.subr.mxu0 0.0
    %135 = vmatpush1.msra.mxu0 %v96
    %136 = vmatprep.subr.mxu0 0.0
    %137 = vmatpush1.msra.mxu0 0.0
    %138 = vmatprep.subr.mxu0 0.0
    %139 = vmatpush1.msra.mxu0 0.0
    %140 = vmatprep.subr.mxu0 0.0
    %141 = vmatpush1.msra.mxu0 0.0
    %142 = vmatprep.subr.mxu0 0.0
    %143 = vmatpush1.msra.mxu0 0.0
    %144 = vmatprep.subr.mxu0 0.0
    %145 = vmatpush1.msra.mxu0 0.0
    %146 = vmatprep.subr.mxu0 0.0
    %147 = vmatpush1.msra.mxu0 0.0
    %148 = vmatprep.subr.mxu0 0.0
    %149 = vmatpush1.msra.mxu0 0.0
    %150 = vmatprep.subr.mxu0 0.0
    %151 = vmatpush1.msra.mxu0 0.0
    %152 = vmatprep.subr.mxu0 0.0
    %153 = vmatpush1.msra.mxu0 0.0
    %154 = vmatprep.subr.mxu0 0.0
    %155 = vmatpush1.msra.mxu0 0.0
    %156 = vmatprep.subr.mxu0 0.0
    %157 = vmatpush1.msra.mxu0 0.0
    %158 = vmatprep.subr.mxu0 0.0
    %159 = vmatpush1.msra.mxu0 0.0
    %160 = vmatprep.subr.mxu0 0.0
    %161 = vmatpush1.msra.mxu0 0.0
    %162 = vmatprep.subr.mxu0 0.0
    %163 = vmatpush1.msra.mxu0 0.0
    %164 = vmatprep.subr.mxu0 0.0
    %165 = vmatpush1.msra.mxu0 0.0
    %166 = vmatprep.subr.mxu0 0.0
    %167 = vmatpush1.msra.mxu0 0.0
    %168 = vmatprep.mubr.f32.mxu0 0.0
    %169 = vmatmul.mubr.f32.gmra.mrb[0].mxu0 %v80
    %v170 = vpop.f32.mrb[0].mxu0
    %v171 = vadd.f32 %v102, %v170
    %v172 = vpop.f32.mrb[0].mxu0
    %173 = vdwg.mxu0
    %v174 = vtanh.pop %v171
    %v175 = vld [vmem:[#allocation7] sm:$0xff]
    %v176 = vld [vmem:[#allocation7 + $0x8] sm:$0xff]
    %v177 = vld [vmem:[#allocation7 + $0x10] sm:$0xff]
    %v178 = vld [vmem:[#allocation7 + $0x18] sm:$0xff]
    %v179 = vld [vmem:[#allocation7 + $0x20] sm:$0xff]
    %v180 = vld [vmem:[#allocation7 + $0x28] sm:$0xff]
    %v181 = vld [vmem:[#allocation7 + $0x30] sm:$0xff]
    %v182 = vld [vmem:[#allocation7 + $0x38] sm:$0xff]
    %v183 = vld [vmem:[#allocation7 + $0x40] sm:$0xff]
    %v184 = vld [vmem:[#allocation7 + $0x48] sm:$0xff]
    %v185 = vld [vmem:[#allocation7 + $0x50] sm:$0xff]
    %v186 = vld [vmem:[#allocation7 + $0x58] sm:$0xff]
    %v187 = vld [vmem:[#allocation7 + $0x60] sm:$0xff]
    %v188 = vld [vmem:[#allocation7 + $0x68] sm:$0xff]
    %v189 = vld [vmem:[#allocation7 + $0x70] sm:$0xff]
    %v190 = vld [vmem:[#allocation7 + $0x78] sm:$0xff]
    %v191 = vld [vmem:[%s4] sm:$0x1]
    %v193 = vlaneseq
    %v194 = vshrl.u32 %v193, 7
    %v195 = vsub.s32 0, %v194
    %v196 = vrot.slane %v191, %v195
    %198 = vmatprep.subr.mxu0 0.0
    %199 = vmatpush1.msra.mxu0 %v175
    %200 = vmatprep.subr.mxu0 0.0
    %201 = vmatpush1.msra.mxu0 %v176
    %202 = vmatprep.subr.mxu0 0.0
    %203 = vmatpush1.msra.mxu0 %v177
    %204 = vmatprep.subr.mxu0 0.0
    %205 = vmatpush1.msra.mxu0 %v178
    %206 = vmatprep.subr.mxu0 0.0
    %207 = vmatpush1.msra.mxu0 %v179
    %208 = vmatprep.subr.mxu0 0.0
    %209 = vmatpush1.msra.mxu0 %v180
    %210 = vmatprep.subr.mxu0 0.0
    %211 = vmatpush1.msra.mxu0 %v181
    %212 = vmatprep.subr.mxu0 0.0
    %213 = vmatpush1.msra.mxu0 %v182
    %214 = vmatprep.subr.mxu0 0.0
    %215 = vmatpush1.msra.mxu0 %v183
    %216 = vmatprep.subr.mxu0 0.0
    %217 = vmatpush1.msra.mxu0 %v184
    %218 = vmatprep.subr.mxu0 0.0
    %219 = vmatpush1.msra.mxu0 %v185
    %220 = vmatprep.subr.mxu0 0.0
    %221 = vmatpush1.msra.mxu0 %v186
    %222 = vmatprep.subr.mxu0 0.0
    %223 = vmatpush1.msra.mxu0 %v187
    %224 = vmatprep.subr.mxu0 0.0
    %225 = vmatpush1.msra.mxu0 %v188
    %226 = vmatprep.subr.mxu0 0.0
    %227 = vmatpush1.msra.mxu0 %v189
    %228 = vmatprep.subr.mxu0 0.0
    %229 = vmatpush1.msra.mxu0 %v190
    %230 = vmatprep.subr.mxu0 0.0
    %231 = vmatpush1.msra.mxu0 0.0
    %232 = vmatprep.subr.mxu0 0.0
    %233 = vmatpush1.msra.mxu0 0.0
    %234 = vmatprep.subr.mxu0 0.0
    %235 = vmatpush1.msra.mxu0 0.0
    %236 = vmatprep.subr.mxu0 0.0
    %237 = vmatpush1.msra.mxu0 0.0
    %238 = vmatprep.subr.mxu0 0.0
    %239 = vmatpush1.msra.mxu0 0.0
    %240 = vmatprep.subr.mxu0 0.0
    %241 = vmatpush1.msra.mxu0 0.0
    %242 = vmatprep.subr.mxu0 0.0
    %243 = vmatpush1.msra.mxu0 0.0
    %244 = vmatprep.subr.mxu0 0.0
    %245 = vmatpush1.msra.mxu0 0.0
    %246 = vmatprep.subr.mxu0 0.0
    %247 = vmatpush1.msra.mxu0 0.0
    %248 = vmatprep.subr.mxu0 0.0
    %249 = vmatpush1.msra.mxu0 0.0
    %250 = vmatprep.subr.mxu0 0.0
    %251 = vmatpush1.msra.mxu0 0.0
    %252 = vmatprep.subr.mxu0 0.0
    %253 = vmatpush1.msra.mxu0 0.0
    %254 = vmatprep.subr.mxu0 0.0
    %255 = vmatpush1.msra.mxu0 0.0
    %256 = vmatprep.subr.mxu0 0.0
    %257 = vmatpush1.msra.mxu0 0.0
    %258 = vmatprep.subr.mxu0 0.0
    %259 = vmatpush1.msra.mxu0 0.0
    %260 = vmatprep.subr.mxu0 0.0
    %261 = vmatpush1.msra.mxu0 0.0
    %262 = vmatprep.mubr.f32.mxu0 0.0
    %263 = vmatmul.mubr.f32.gmra.mrb[0].mxu0 %v174
    %v264 = vpop.f32.mrb[0].mxu0
    %v265 = vadd.f32 %v196, %v264
    %v266 = vpop.f32.mrb[0].mxu0
    %267 = vdwg.mxu0
    %v268 = vtanh.pop %v265
    %s269 = scalar_lea.vmem [#allocation7], 128
    %v270 = vld [vmem:[%s269] sm:$0xff]
    %v271 = vld [vmem:[%s269 + $0x8] sm:$0xff]
    %v272 = vld [vmem:[%s269 + $0x10] sm:$0xff]
    %v273 = vld [vmem:[%s269 + $0x18] sm:$0xff]
    %v274 = vld [vmem:[%s269 + $0x20] sm:$0xff]
    %v275 = vld [vmem:[%s269 + $0x28] sm:$0xff]
    %v276 = vld [vmem:[%s269 + $0x30] sm:$0xff]
    %v277 = vld [vmem:[%s269 + $0x38] sm:$0xff]
    %v278 = vld [vmem:[%s269 + $0x40] sm:$0xff]
    %v279 = vld [vmem:[%s269 + $0x48] sm:$0xff]
    %v280 = vld [vmem:[%s269 + $0x50] sm:$0xff]
    %v281 = vld [vmem:[%s269 + $0x58] sm:$0xff]
    %v282 = vld [vmem:[%s269 + $0x60] sm:$0xff]
    %v283 = vld [vmem:[%s269 + $0x68] sm:$0xff]
    %v284 = vld [vmem:[%s269 + $0x70] sm:$0xff]
    %v285 = vld [vmem:[%s269 + $0x78] sm:$0xff]
    %s286 = scalar_lea.vmem %s4, 1
    %v287 = vld [vmem:[%s286] sm:$0x1]
    %v289 = vlaneseq
    %v290 = vshrl.u32 %v289, 7
    %v291 = vsub.s32 0, %v290
    %v292 = vrot.slane %v287, %v291
    %294 = vmatprep.subr.mxu0 0.0
    %295 = vmatpush1.msra.mxu0 %v270
    %296 = vmatprep.subr.mxu0 0.0
    %297 = vmatpush1.msra.mxu0 %v271
    %298 = vmatprep.subr.mxu0 0.0
    %299 = vmatpush1.msra.mxu0 %v272
    %300 = vmatprep.subr.mxu0 0.0
    %301 = vmatpush1.msra.mxu0 %v273
    %302 = vmatprep.subr.mxu0 0.0
    %303 = vmatpush1.msra.mxu0 %v274
    %304 = vmatprep.subr.mxu0 0.0
    %305 = vmatpush1.msra.mxu0 %v275
    %306 = vmatprep.subr.mxu0 0.0
    %307 = vmatpush1.msra.mxu0 %v276
    %308 = vmatprep.subr.mxu0 0.0
    %309 = vmatpush1.msra.mxu0 %v277
    %310 = vmatprep.subr.mxu0 0.0
    %311 = vmatpush1.msra.mxu0 %v278
    %312 = vmatprep.subr.mxu0 0.0
    %313 = vmatpush1.msra.mxu0 %v279
    %314 = vmatprep.subr.mxu0 0.0
    %315 = vmatpush1.msra.mxu0 %v280
    %316 = vmatprep.subr.mxu0 0.0
    %317 = vmatpush1.msra.mxu0 %v281
    %318 = vmatprep.subr.mxu0 0.0
    %319 = vmatpush1.msra.mxu0 %v282
    %320 = vmatprep.subr.mxu0 0.0
    %321 = vmatpush1.msra.mxu0 %v283
    %322 = vmatprep.subr.mxu0 0.0
    %323 = vmatpush1.msra.mxu0 %v284
    %324 = vmatprep.subr.mxu0 0.0
    %325 = vmatpush1.msra.mxu0 %v285
    %326 = vmatprep.subr.mxu0 0.0
    %327 = vmatpush1.msra.mxu0 0.0
    %328 = vmatprep.subr.mxu0 0.0
    %329 = vmatpush1.msra.mxu0 0.0
    %330 = vmatprep.subr.mxu0 0.0
    %331 = vmatpush1.msra.mxu0 0.0
    %332 = vmatprep.subr.mxu0 0.0
    %333 = vmatpush1.msra.mxu0 0.0
    %334 = vmatprep.subr.mxu0 0.0
    %335 = vmatpush1.msra.mxu0 0.0
    %336 = vmatprep.subr.mxu0 0.0
    %337 = vmatpush1.msra.mxu0 0.0
    %338 = vmatprep.subr.mxu0 0.0
    %339 = vmatpush1.msra.mxu0 0.0
    %340 = vmatprep.subr.mxu0 0.0
    %341 = vmatpush1.msra.mxu0 0.0
    %342 = vmatprep.subr.mxu0 0.0
    %343 = vmatpush1.msra.mxu0 0.0
    %344 = vmatprep.subr.mxu0 0.0
    %345 = vmatpush1.msra.mxu0 0.0
    %346 = vmatprep.subr.mxu0 0.0
    %347 = vmatpush1.msra.mxu0 0.0
    %348 = vmatprep.subr.mxu0 0.0
    %349 = vmatpush1.msra.mxu0 0.0
    %350 = vmatprep.subr.mxu0 0.0
    %351 = vmatpush1.msra.mxu0 0.0
    %352 = vmatprep.subr.mxu0 0.0
    %353 = vmatpush1.msra.mxu0 0.0
    %354 = vmatprep.subr.mxu0 0.0
    %355 = vmatpush1.msra.mxu0 0.0
    %356 = vmatprep.subr.mxu0 0.0
    %357 = vmatpush1.msra.mxu0 0.0
    %358 = vmatprep.mubr.f32.mxu0 0.0
    %359 = vmatmul.mubr.f32.gmra.mrb[0].mxu0 %v268
    %v360 = vpop.f32.mrb[0].mxu0
    %v361 = vadd.f32 %v292, %v360
    %v362 = vpop.f32.mrb[0].mxu0
    %363 = vdwg.mxu0
    %v364 = vtanh.pop %v361
    %v365 = vld [vmem:[#allocation8] sm:$0xff]
    %v366 = vld [vmem:[#allocation8 + $0x8] sm:$0xff]
    %v367 = vld [vmem:[#allocation8 + $0x10] sm:$0xff]
    %v368 = vld [vmem:[#allocation8 + $0x18] sm:$0xff]
    %v369 = vld [vmem:[#allocation8 + $0x20] sm:$0xff]
    %v370 = vld [vmem:[#allocation8 + $0x28] sm:$0xff]
    %v371 = vld [vmem:[#allocation8 + $0x30] sm:$0xff]
    %v372 = vld [vmem:[#allocation8 + $0x38] sm:$0xff]
    %v373 = vld [vmem:[#allocation8 + $0x40] sm:$0xff]
    %v374 = vld [vmem:[#allocation8 + $0x48] sm:$0xff]
    %v375 = vld [vmem:[#allocation8 + $0x50] sm:$0xff]
    %v376 = vld [vmem:[#allocation8 + $0x58] sm:$0xff]
    %v377 = vld [vmem:[#allocation8 + $0x60] sm:$0xff]
    %v378 = vld [vmem:[#allocation8 + $0x68] sm:$0xff]
    %v379 = vld [vmem:[#allocation8 + $0x70] sm:$0xff]
    %v380 = vld [vmem:[#allocation8 + $0x78] sm:$0xff]
    %v381 = vld [vmem:[%s6] sm:$0x1]
    %v383 = vlaneseq
    %v384 = vshrl.u32 %v383, 7
    %v385 = vsub.s32 0, %v384
    %v386 = vrot.slane %v381, %v385
    %388 = vmatprep.subr.mxu0 0.0
    %389 = vmatpush1.msra.mxu0 %v365
    %390 = vmatprep.subr.mxu0 0.0
    %391 = vmatpush1.msra.mxu0 %v366
    %392 = vmatprep.subr.mxu0 0.0
    %393 = vmatpush1.msra.mxu0 %v367
    %394 = vmatprep.subr.mxu0 0.0
    %395 = vmatpush1.msra.mxu0 %v368
    %396 = vmatprep.subr.mxu0 0.0
    %397 = vmatpush1.msra.mxu0 %v369
    %398 = vmatprep.subr.mxu0 0.0
    %399 = vmatpush1.msra.mxu0 %v370
    %400 = vmatprep.subr.mxu0 0.0
    %401 = vmatpush1.msra.mxu0 %v371
    %402 = vmatprep.subr.mxu0 0.0
    %403 = vmatpush1.msra.mxu0 %v372
    %404 = vmatprep.subr.mxu0 0.0
    %405 = vmatpush1.msra.mxu0 %v373
    %406 = vmatprep.subr.mxu0 0.0
    %407 = vmatpush1.msra.mxu0 %v374
    %408 = vmatprep.subr.mxu0 0.0
    %409 = vmatpush1.msra.mxu0 %v375
    %410 = vmatprep.subr.mxu0 0.0
    %411 = vmatpush1.msra.mxu0 %v376
    %412 = vmatprep.subr.mxu0 0.0
    %413 = vmatpush1.msra.mxu0 %v377
    %414 = vmatprep.subr.mxu0 0.0
    %415 = vmatpush1.msra.mxu0 %v378
    %416 = vmatprep.subr.mxu0 0.0
    %417 = vmatpush1.msra.mxu0 %v379
    %418 = vmatprep.subr.mxu0 0.0
    %419 = vmatpush1.msra.mxu0 %v380
    %420 = vmatprep.subr.mxu0 0.0
    %421 = vmatpush1.msra.mxu0 0.0
    %422 = vmatprep.subr.mxu0 0.0
    %423 = vmatpush1.msra.mxu0 0.0
    %424 = vmatprep.subr.mxu0 0.0
    %425 = vmatpush1.msra.mxu0 0.0
    %426 = vmatprep.subr.mxu0 0.0
    %427 = vmatpush1.msra.mxu0 0.0
    %428 = vmatprep.subr.mxu0 0.0
    %429 = vmatpush1.msra.mxu0 0.0
    %430 = vmatprep.subr.mxu0 0.0
    %431 = vmatpush1.msra.mxu0 0.0
    %432 = vmatprep.subr.mxu0 0.0
    %433 = vmatpush1.msra.mxu0 0.0
    %434 = vmatprep.subr.mxu0 0.0
    %435 = vmatpush1.msra.mxu0 0.0
    %436 = vmatprep.subr.mxu0 0.0
    %437 = vmatpush1.msra.mxu0 0.0
    %438 = vmatprep.subr.mxu0 0.0
    %439 = vmatpush1.msra.mxu0 0.0
    %440 = vmatprep.subr.mxu0 0.0
    %441 = vmatpush1.msra.mxu0 0.0
    %442 = vmatprep.subr.mxu0 0.0
    %443 = vmatpush1.msra.mxu0 0.0
    %444 = vmatprep.subr.mxu0 0.0
    %445 = vmatpush1.msra.mxu0 0.0
    %446 = vmatprep.subr.mxu0 0.0
    %447 = vmatpush1.msra.mxu0 0.0
    %448 = vmatprep.subr.mxu0 0.0
    %449 = vmatpush1.msra.mxu0 0.0
    %450 = vmatprep.subr.mxu0 0.0
    %451 = vmatpush1.msra.mxu0 0.0
    %452 = vmatprep.mubr.f32.mxu0 0.0
    %453 = vmatmul.mubr.f32.gmra.mrb[0].mxu0 %v364
    %v454 = vpop.f32.mrb[0].mxu0
    %v455 = vadd.f32 %v386, %v454
    %v456 = vpop.f32.mrb[0].mxu0
    %457 = vdwg.mxu0
    %458 = vst [vmem:[#allocation10] sm:$0xff] %v455
    // Predicated region
    $region46: #{tpu_custom_call.1} parent=1 // pred_check
      _
    $region47: #{tpu_custom_call.1} parent=1 // pred_check_branch
      %460 = sbr.rel (0) target = $region49
    $region48: #{tpu_custom_call.1} parent=1 // pred_region
      %s462 = ssub.s32 128, 128
      %463 = vsyncadd [#allocation4], %s462
      %s465 = sshll.u32 [#allocation10], 4
      %s466 = int_to_ptr.vmem [resolvable:$true] %s465
      %468 = dma.vmem_to_hbm [thread:$0]  %s466, 128, %s7, [#allocation4]
    $region49: #{tpu_custom_call.1} parent=1 // pred_fallthru
      _
    // Predicated region
    $region50: #{tpu_custom_call.1} parent=1 // pred_check
      _
    $region51: #{tpu_custom_call.1} parent=1 // pred_check_branch
      %470 = sbr.rel (0) target = $region53
    $region52: #{tpu_custom_call.1} parent=1 // pred_region
      %471 = dma.done [#allocation4], 128
    $region53: #{tpu_custom_call.1} parent=1 // pred_fallthru
      _
    %472 = vsyncpa [#allocation3], 1
    %473 = vsyncpa [#allocation6], 1
    %474 = vsyncpa [#allocation9], 1
    %475 = vsyncpa [#allocation4], 1

</llo_original>
